<compile_context>
chip_gen: v5e
topology: v5e:2x2
jax: 0.10.0
libtpu: 0.0.40
codegen_flags: <defaults>
</compile_context>

<pallas_src>
import jax
import jax.numpy as jnp
from jax.experimental import pallas as pl
from jax.experimental.pallas import tpu as pltpu


_NEG_INF = float("-inf")
# Per-block VMEM budget for one x tile (the pipeline double-buffers it).
_X_BLOCK_BYTES = 4 * 1024 * 1024


def _masked_pool_kernel(x_ref, m_ref, o_ref):
    # Output block is resident across the seq grid axis -> running max.
    @pl.when(pl.program_id(1) == 0)
    def _init():
        o_ref[...] = jnp.full(o_ref.shape, _NEG_INF, o_ref.dtype)

    # (TB, TS, D) * (TB, TS, 1): lane broadcast; same semantics as PyTorch's
    # x * masked_fill(~mask, -inf) followed by amax over seq.
    xm = x_ref[...] * m_ref[...]
    o_ref[...] = jnp.maximum(o_ref[...], jnp.max(xm, axis=1))


def _plain_pool_kernel(x_ref, o_ref):
    @pl.when(pl.program_id(1) == 0)
    def _init():
        o_ref[...] = jnp.full(o_ref.shape, _NEG_INF, o_ref.dtype)

    o_ref[...] = jnp.maximum(o_ref[...], jnp.max(x_ref[...], axis=1))


def _largest_aligned_divisor(n, upper, align):
    """Largest divisor of n that is <= upper and a multiple of `align`.

    Falls back to n (the full extent is always a legal block size)."""
    upper = min(upper, n)
    for t in range(upper, 0, -1):
        if n % t == 0 and t % align == 0:
            return t
    return n


def _pick_tiles(B, S, D, dtype, batch_tile, seq_tile):
    itemsize = jnp.dtype(dtype).itemsize
    sublane = max(8, 32 // itemsize)  # 8 for f32, 16 for bf16, 32 for int8

    if batch_tile is None:
        # Output block's sublane dim is TB: multiple of 8 or the full B.
        TB = 8 if (B % 8 == 0 and B > 8) else B
    else:
        TB = batch_tile

    if seq_tile is None:
        # Big tiles (hundreds of sublane rows) but keep a double-buffered x
        # block comfortably inside scoped VMEM on every TPU generation.
        ts_budget = max(sublane, _X_BLOCK_BYTES // max(1, TB * D * itemsize))
        TS = _largest_aligned_divisor(S, min(S, 512, ts_budget), sublane)
    else:
        TS = seq_tile

    assert B % TB == 0 and S % TS == 0, (TB, TS)
    return TB, TS


def global_max_pooling_1d(x, attention_mask=None, *, batch_tile=None, seq_tile=None):
    """Pallas TPU equivalent of GlobalMaxPooling1D.forward.

    Args:
        x: (batch, seq_len, embedding_dim) floating-point array.
        attention_mask: optional (batch, seq_len) array (bool or 0/1 valued).
    Returns:
        (batch, embedding_dim) array with x's dtype.
    """
    B, S, D = x.shape
    TB, TS = _pick_tiles(B, S, D, x.dtype, batch_tile, seq_tile)
    grid = (B // TB, S // TS)
    itemsize = jnp.dtype(x.dtype).itemsize

    out_shape = jax.ShapeDtypeStruct((B, D), x.dtype)
    out_spec = pl.BlockSpec((TB, D), lambda b, s: (b, 0))
    x_spec = pl.BlockSpec((TB, TS, D), lambda b, s: (b, s, 0))

    compiler_params = pltpu.CompilerParams(
        dimension_semantics=("parallel", "arbitrary"),
        vmem_limit_bytes=32 * 1024 * 1024,
    )

    if attention_mask is None:
        cost = pl.CostEstimate(
            flops=B * S * D,
            transcendentals=0,
            bytes_accessed=(B * S * D + B * D) * itemsize,
        )
        return pl.pallas_call(
            _plain_pool_kernel,
            out_shape=out_shape,
            grid=grid,
            in_specs=[x_spec],
            out_specs=out_spec,
            compiler_params=compiler_params,
            cost_estimate=cost,
        )(x)

    # PyTorch: mask.masked_fill(mask.logical_not(), -inf).to(x.dtype).unsqueeze(-1)
    # Precompute the filled mask (only B*S elements) and lay it out as
    # (B, S, 1) so seq lands on sublanes just like x.
    neg_inf = jnp.array(_NEG_INF, dtype=x.dtype)
    m_filled = jnp.where(attention_mask != 0, attention_mask.astype(x.dtype), neg_inf)
    m3 = m_filled[:, :, None]  # (B, S, 1)
    m_spec = pl.BlockSpec((TB, TS, 1), lambda b, s: (b, s, 0))

    cost = pl.CostEstimate(
        flops=2 * B * S * D,
        transcendentals=0,
        bytes_accessed=(B * S * D + B * S + B * D) * itemsize,
    )
    return pl.pallas_call(
        _masked_pool_kernel,
        out_shape=out_shape,
        grid=grid,
        in_specs=[x_spec, m_spec],
        out_specs=out_spec,
        compiler_params=compiler_params,
        cost_estimate=cost,
    )(x, m3)


def _reference(x, attention_mask=None):
    # Direct port of the PyTorch forward (including the multiply-by--inf mask).
    if attention_mask is not None:
        m = jnp.where(attention_mask != 0,
                      attention_mask.astype(x.dtype),
                      jnp.array(_NEG_INF, dtype=x.dtype))
        x = x * m[:, :, None]
    return jnp.max(x, axis=1)


if __name__ == "__main__":
    key = jax.random.PRNGKey(0)
    k1, k2, k3, k4 = jax.random.split(key, 4)

    # Case 1: small shape matching the module spec (single grid step).
    B, S, D = 2, 8, 32
    x = jax.random.normal(k1, (B, S, D), dtype=jnp.float32)
    mask = (jax.random.uniform(k2, (B, S)) > 0.3).astype(jnp.float32)
    mask = mask.at[:, 0].set(1.0)  # at least one valid timestep per row

    out_masked = jax.block_until_ready(global_max_pooling_1d(x, mask))
    out_plain = jax.block_until_ready(global_max_pooling_1d(x))
    assert out_masked.shape == (B, D) and out_plain.shape == (B, D)
    assert jnp.allclose(out_masked, _reference(x, mask))
    assert jnp.allclose(out_plain, _reference(x))

    # Case 2: bigger shape with explicit tiles so the (batch, seq) grid and the
    # running-max accumulator are actually exercised (grid = (2, 4)).
    B2, S2, D2 = 16, 256, 128
    x2 = jax.random.normal(k3, (B2, S2, D2), dtype=jnp.float32)
    mask2 = (jax.random.uniform(k4, (B2, S2)) > 0.3).astype(jnp.float32)
    mask2 = mask2.at[:, 0].set(1.0)

    out2m = jax.block_until_ready(
        global_max_pooling_1d(x2, mask2, batch_tile=8, seq_tile=64))
    out2p = jax.block_until_ready(
        global_max_pooling_1d(x2, batch_tile=8, seq_tile=64))
    assert jnp.allclose(out2m, _reference(x2, mask2))
    assert jnp.allclose(out2p, _reference(x2))

    print("KERNEL_OK")
</pallas_src>

<mosaic_0001>
module attributes {stable_mosaic.version = 11 : i64} {
  func.func @_masked_pool_kernel(%arg0: i32, %arg1: i32, %arg2: memref<2x8x32xf32, #tpu.memory_space<vmem>>, %arg3: memref<2x8x1xf32, #tpu.memory_space<vmem>>, %arg4: memref<2x32xf32, #tpu.memory_space<vmem>>) attributes {dimension_semantics = [#tpu.dimension_semantics<parallel>, #tpu.dimension_semantics<arbitrary>], iteration_bounds = array<i64: 1, 1>, scalar_prefetch = 0 : i64, scratch_operands = 0 : i64, tpu.core_type = #tpu.core_type<tc>, window_params = [{transform_indices = @transform_0, window_bounds = array<i64: 2, 8, 32>}, {transform_indices = @transform_1, window_bounds = array<i64: 2, 8, 1>}, {transform_indices = @transform_2, window_bounds = array<i64: 2, 32>}]} {
    %c0_i32 = arith.constant 0 : i32
    %0 = arith.cmpi eq, %arg1, %c0_i32 : i32
    %1 = arith.extui %0 : i1 to i32
    %c0_i32_0 = arith.constant 0 : i32
    %2 = arith.cmpi ne, %1, %c0_i32_0 : i32
    scf.if %2 {
      %cst_10 = arith.constant 0xFF800000 : f32
      %11 = vector.broadcast %cst_10 : f32 to vector<2x32xf32>
      %c0_11 = arith.constant 0 : index
      %c0_12 = arith.constant 0 : index
      %12 = vector.load %arg4[%c0_11, %c0_12] : memref<2x32xf32, #tpu.memory_space<vmem>>, vector<2x32xf32>
      tpu.vector_store %arg4[%c0_11, %c0_12], %11 {strides = array<i32>} : memref<2x32xf32, #tpu.memory_space<vmem>>, vector<2x32xf32>,
    } else {
    }
    %c0 = arith.constant 0 : index
    %c0_1 = arith.constant 0 : index
    %c0_2 = arith.constant 0 : index
    %3 = vector.load %arg2[%c0, %c0_1, %c0_2] : memref<2x8x32xf32, #tpu.memory_space<vmem>>, vector<2x8x32xf32>
    %c0_3 = arith.constant 0 : index
    %c0_4 = arith.constant 0 : index
    %c0_5 = arith.constant 0 : index
    %4 = vector.load %arg3[%c0_3, %c0_4, %c0_5] : memref<2x8x1xf32, #tpu.memory_space<vmem>>, vector<2x8x1xf32>
    %5 = vector.broadcast %4 : vector<2x8x1xf32> to vector<2x8x32xf32>
    %6 = arith.mulf %3, %5 : vector<2x8x32xf32>
    %c0_6 = arith.constant 0 : index
    %c0_7 = arith.constant 0 : index
    %7 = vector.load %arg4[%c0_6, %c0_7] : memref<2x32xf32, #tpu.memory_space<vmem>>, vector<2x32xf32>
    %cst = arith.constant dense<0xFF800000> : vector<2x32xf32>
    %8 = vector.multi_reduction <maximumf>, %6, %cst [1] : vector<2x8x32xf32> to vector<2x32xf32>
    %9 = arith.maximumf %7, %8 : vector<2x32xf32>
    %c0_8 = arith.constant 0 : index
    %c0_9 = arith.constant 0 : index
    %10 = vector.load %arg4[%c0_8, %c0_9] : memref<2x32xf32, #tpu.memory_space<vmem>>, vector<2x32xf32>
    tpu.vector_store %arg4[%c0_8, %c0_9], %9 {strides = array<i32>} : memref<2x32xf32, #tpu.memory_space<vmem>>, vector<2x32xf32>,
    return
  }
  func.func @transform_0(%arg0: i32, %arg1: i32) -> (i32, i32, i32) {
    %c0_i32 = arith.constant 0 : i32
    %c0_i32_0 = arith.constant 0 : i32
    return %arg0, %arg1, %c0_i32 : i32, i32, i32
  }
  func.func @transform_1(%arg0: i32, %arg1: i32) -> (i32, i32, i32) {
    %c0_i32 = arith.constant 0 : i32
    %c0_i32_0 = arith.constant 0 : i32
    return %arg0, %arg1, %c0_i32 : i32, i32, i32
  }
  func.func @transform_2(%arg0: i32, %arg1: i32) -> (i32, i32) {
    %c0_i32 = arith.constant 0 : i32
    %c0_i32_0 = arith.constant 0 : i32
    return %arg0, %c0_i32 : i32, i32
  }
}

</mosaic_0001>

<llo_original>
// kernel: tpu_custom_call.1
$region0: #{tpu_custom_call.1}
  #allocation0 [shape = 'u32[]', space=smem, size = 0x4, offset = 0x4, fixed_abs, tag = 'smem constant byte address 0x4 - core index']
  #allocation1 [shape = 'u32[72,128]{1,0:T(1,128)}', space=vmem, size = 0x9000, scoped, tag = 'internal scratch']
  %s0 = inlined_call_operand.vmem [shape: f32[2,8,32], index: 0, kind: input, shape index: {}]
  %s1 = inlined_call_operand.vmem [shape: f32[2,8,1], index: 1, kind: input, shape index: {}]
  %s2 = inlined_call_operand.hbm [shape: f32[2,32], index: 2, kind: output, shape index: {}]
  %s3 = sld [smem:[#allocation0]]
  $region22: #{tpu_custom_call.1} parent=0
    _
  %s5 = ssub.s32 1, %s3
  %s6 = scalar_select 0, %s5, %s3
  $region1: #{tpu_custom_call.1} parent=0
    #allocation2 [shape = 'u8[1024]{0}', space=vmem, size = 0x400, scoped, tag = 'output window, operand 0, single buffered']
    #allocation3 [shape = 's32[1]{0}', space=sflag, size = 0x4, scoped, tag = 'scoped memory for tpu_custom_call.1']
    %7 = vsyncpa [#allocation3], 0
    // Predicated region
    $region2: #{tpu_custom_call.1} parent=1 // pred_check
      _
    $region3: #{tpu_custom_call.1} parent=1 // pred_check_branch
      %9 = sbr.rel (0) target = $region5
    $region4: #{tpu_custom_call.1} parent=1 // pred_region
      _
    $region5: #{tpu_custom_call.1} parent=1 // pred_fallthru
      _
    // Predicated region
    $region6: #{tpu_custom_call.1} parent=1 // pred_check
      _
    $region7: #{tpu_custom_call.1} parent=1 // pred_check_branch
      %11 = sbr.rel (0) target = $region9
    $region8: #{tpu_custom_call.1} parent=1 // pred_region
      _
    $region9: #{tpu_custom_call.1} parent=1 // pred_fallthru
      _
    %p12 = scmp.eq.s32.totalorder 0, 0
    // Predicated region
    $region10: #{tpu_custom_call.1} parent=1 // pred_check
      %p13 = pneg %p12
    $region11: #{tpu_custom_call.1} parent=1 // pred_check_branch
      %15 = sbr.rel (%p13) target = $region13
    $region12: #{tpu_custom_call.1} parent=1 // pred_region
      %vm16 = vcmask 254976
      %17 = vst.msk [vmem:[#allocation2] sm:$0x3] %vm16, -inf
    $region13: #{tpu_custom_call.1} parent=1 // pred_fallthru
      _
    %v18 = vld [vmem:[%s0] sm:$0xff]
    %v19 = vld [vmem:[%s0 + $0x8] sm:$0xff]
    %v20 = vld [vmem:[%s1] sm:$0xff]
    %v21 = vld [vmem:[%s1 + $0x8] sm:$0xff]
    %23 = vset.pattern.permute.xlu0 0
    %24 = vperm.xlu0 %23, %v20
    %v25 = vpop.permute.xlu0 %24
    %28 = vset.pattern.permute.xlu0 0
    %29 = vperm.xlu0 %28, %v21
    %v30 = vpop.permute.xlu0 %29
    %v32 = vmul.f32 %v18, %v25
    %v33 = vmul.f32 %v19, %v30
    %v34 = vld [vmem:[#allocation2] sm:$0x3]
    %vm35 = vcmask 261120
    %v36 = vsel %vm35, %v32, -inf
    %v37 = vrot.slane %v36, 4
    %v38 = vmax.f32 %v36, %v37
    %v39 = vrot.slane %v38, 2
    %v40 = vmax.f32 %v38, %v39
    %v41 = vrot.slane %v40, 1
    %v42 = vmax.f32 %v40, %v41
    %v43 = vsel %vm35, %v33, -inf
    %v44 = vrot.slane %v43, 4
    %v45 = vmax.f32 %v43, %v44
    %v46 = vrot.slane %v45, 2
    %v47 = vmax.f32 %v45, %v46
    %v48 = vrot.slane %v47, 1
    %v49 = vmax.f32 %v47, %v48
    %vm52 = vcmask 1041409
    %v53 = vsel %vm52, %v49, %v42
    %v55 = vmax.f32 %v34, %v53
    %vm56 = vcmask 254976
    %57 = vst.msk [vmem:[#allocation2] sm:$0x3] %vm56, %v55
    // Predicated region
    $region14: #{tpu_custom_call.1} parent=1 // pred_check
      _
    $region15: #{tpu_custom_call.1} parent=1 // pred_check_branch
      %59 = sbr.rel (0) target = $region17
    $region16: #{tpu_custom_call.1} parent=1 // pred_region
      %61 = vsyncadd [#allocation3], 0
      %s63 = sshll.u32 [#allocation2], 4
      %s64 = int_to_ptr.vmem [resolvable:$true] %s63
      %s65 = sshll.u32 %s2, 4
      %s66 = int_to_ptr.hbm [resolvable:$true] %s65
      %68 = dma.vmem_to_hbm [thread:$0]  %s64, 32, %s66, [#allocation3]
    $region17: #{tpu_custom_call.1} parent=1 // pred_fallthru
      _
    // Predicated region
    $region18: #{tpu_custom_call.1} parent=1 // pred_check
      _
    $region19: #{tpu_custom_call.1} parent=1 // pred_check_branch
      %70 = sbr.rel (0) target = $region21
    $region20: #{tpu_custom_call.1} parent=1 // pred_region
      %72 = dma.done [#allocation3], 32
    $region21: #{tpu_custom_call.1} parent=1 // pred_fallthru
      _
    %73 = vsyncpa [#allocation3], 1

</llo_original>
